<compile_context>
chip_gen: v7x
topology: tpu7x:2x2x1
jax: 0.10.0
libtpu: 0.0.40
codegen_flags: <defaults>
</compile_context>

<pallas_src>
import functools

import jax
import jax.numpy as jnp
from jax.experimental import pallas as pl
from jax.experimental.pallas import tpu as pltpu

_EPS = 1e-5


# ---------------------------------------------------------------------------
# Helpers: VMEM budget + tile pickers (budget-driven, alignment-aware)
# ---------------------------------------------------------------------------
def _vmem_budget():
    """Usable VMEM budget in bytes for this chip generation (with headroom)."""
    cap = None
    try:
        info = pltpu.get_tpu_info()
        cap = getattr(info, "vmem_capacity_bytes", None)
    except Exception:
        cap = None
    if not cap:
        cap = 64 * 1024 * 1024  # conservative (v7x-sized) fallback
    return int(min(cap * 7 // 10, 96 * 1024 * 1024))


def _round_down(v, m):
    return max(m, (v // m) * m)


def _c_align(itemsize):
    # sublane packing: 8 rows for 32-bit, 16 for bf16, 32 for int8/fp8
    return max(8, 32 // max(1, itemsize))


def _pick_c_tile(C, c_align, max_c):
    """Channel (sublane) tile: multiple of c_align, or full C when C <= align.

    Prefers >= 2 channel blocks when possible (keeps both v7x TensorCores busy
    on the channel-parallel axis) and prefers exact divisors of C; otherwise a
    cdiv grid with a harmless out-of-bounds channel tail is used (per-channel
    stats are independent, OOB output rows are dropped on write-back).
    """
    if C <= c_align:
        return C
    cap = _round_down(min(C, max_c), c_align)
    # guarantee >= 2 channel blocks when C allows it (megacore / v7x)
    cap = min(cap, _round_down(C - 1, c_align))
    for cand in range(cap, c_align - 1, -c_align):
        if C % cand == 0:
            return cand
    return cap


def _pick_l_tile(L, max_elems_per_row):
    """Lane tile: multiple of 128 (full L when L < 128); cdiv + mask handles tails."""
    if L <= 128:
        return L
    return _round_down(min(L, max_elems_per_row), 128)


def _pick_stream_tiles(N, C, L, itemsize, c_align, budget):
    """Per-step x block for the streaming path: target multi-MiB, N folded in."""
    target_bytes = max(1 << 20, min(8 << 20, budget // 8))
    max_elems = max(1, target_bytes // itemsize)
    c_min = C if C <= c_align else c_align
    if N * c_min * L <= max_elems:
        # full-L lane dimension fits: widen over channels instead
        max_c = max(c_min, max_elems // max(1, N * L))
        return _pick_c_tile(C, c_align, max_c), L
    c_tile = c_min
    per_row = max(128, max_elems // max(1, N * c_tile))
    return c_tile, _pick_l_tile(L, per_row)


# ---------------------------------------------------------------------------
# Fused single-pass kernel: stats + normalize on a resident (N, c_tile, L) slab
# ---------------------------------------------------------------------------
def _fused_kernel(x_ref, gamma_ref, beta_ref, o_ref, *, inv_count, eps):
    x = x_ref[...].astype(jnp.float32)                       # (N, c_tile, L)
    s = jnp.sum(jnp.sum(x, axis=0), axis=-1, keepdims=True)  # (c_tile, 1)
    mean = s * inv_count
    xc = x - mean[None]                                       # centered
    v = jnp.sum(jnp.sum(xc * xc, axis=0), axis=-1, keepdims=True) * inv_count
    scale = gamma_ref[...].astype(jnp.float32) * jax.lax.rsqrt(v + eps)
    beta = beta_ref[...].astype(jnp.float32)
    o_ref[...] = (xc * scale[None] + beta[None]).astype(o_ref.dtype)


def _bn_fused(x3, gamma, beta, c_tile, vmem_limit, eps):
    N, C, L = x3.shape
    isz = x3.dtype.itemsize
    grid = (pl.cdiv(C, c_tile),)
    nelem = N * C * L
    kernel = functools.partial(_fused_kernel, inv_count=1.0 / float(N * L), eps=eps)
    return pl.pallas_call(
        kernel,
        out_shape=jax.ShapeDtypeStruct((N, C, L), x3.dtype),
        grid_spec=pltpu.PrefetchScalarGridSpec(
            num_scalar_prefetch=0,
            grid=grid,
            in_specs=[
                pl.BlockSpec((N, c_tile, L), lambda c: (0, c, 0)),
                pl.BlockSpec((c_tile, 1), lambda c: (c, 0)),
                pl.BlockSpec((c_tile, 1), lambda c: (c, 0)),
            ],
            out_specs=pl.BlockSpec((N, c_tile, L), lambda c: (0, c, 0)),
        ),
        compiler_params=pltpu.CompilerParams(
            dimension_semantics=("parallel",),
            vmem_limit_bytes=int(vmem_limit)),
        cost_estimate=pl.CostEstimate(
            flops=int(7 * nelem),
            transcendentals=int(C),
            bytes_accessed=int(2 * nelem * isz + 8 * C)),
    )(x3, gamma, beta)


# ---------------------------------------------------------------------------
# Streaming two-pass fallback (x too large to keep per-channel slab in VMEM)
# ---------------------------------------------------------------------------
def _stats_kernel(x_ref, gamma_ref, beta_ref, scale_ref, shift_ref,
                  sum_sc, sq_sc, *, inv_count, eps, total_l, l_tile, need_mask):
    l = pl.program_id(1)

    @pl.when(l == 0)
    def _init():
        sum_sc[...] = jnp.zeros_like(sum_sc)
        sq_sc[...] = jnp.zeros_like(sq_sc)

    x = x_ref[...].astype(jnp.float32)        # (N, c_tile, l_tile)
    if need_mask:
        gidx = l * l_tile + jax.lax.broadcasted_iota(jnp.int32, x.shape, 2)
        x = jnp.where(gidx < total_l, x, 0.0)

    xs = jnp.sum(x, axis=0)                   # (c_tile, l_tile) leading-dim add
    xs2 = jnp.sum(x * x, axis=0)
    sum_sc[...] += jnp.sum(xs, axis=1, keepdims=True)
    sq_sc[...] += jnp.sum(xs2, axis=1, keepdims=True)

    @pl.when(l == pl.num_programs(1) - 1)
    def _finalize():
        mean = sum_sc[...] * inv_count
        # TODO(synk): shifted / compensated accumulation for extreme per-channel
        # element counts; f32 E[x^2]-mean^2 with a clamp is used on this path.
        var = jnp.maximum(sq_sc[...] * inv_count - mean * mean, 0.0)
        scale = gamma_ref[...].astype(jnp.float32) * jax.lax.rsqrt(var + eps)
        scale_ref[...] = scale
        shift_ref[...] = beta_ref[...].astype(jnp.float32) - mean * scale


def _normalize_kernel(x_ref, scale_ref, shift_ref, o_ref):
    x = x_ref[...].astype(jnp.float32)                 # (N, c_tile, l_tile)
    y = x * scale_ref[...][None] + shift_ref[...][None]
    o_ref[...] = y.astype(o_ref.dtype)


def _bn_two_pass(x3, gamma, beta, c_tile, l_tile, vmem_limit, eps=_EPS):
    N, C, L = x3.shape
    isz = x3.dtype.itemsize
    c_blocks = pl.cdiv(C, c_tile)
    l_blocks = pl.cdiv(L, l_tile)
    need_mask = (L % l_tile) != 0
    nelem = N * C * L

    stats_kernel = functools.partial(
        _stats_kernel, inv_count=1.0 / float(N * L), eps=eps,
        total_l=L, l_tile=l_tile, need_mask=need_mask)

    scale, shift = pl.pallas_call(
        stats_kernel,
        out_shape=(jax.ShapeDtypeStruct((C, 1), jnp.float32),
                   jax.ShapeDtypeStruct((C, 1), jnp.float32)),
        grid_spec=pltpu.PrefetchScalarGridSpec(
            num_scalar_prefetch=0,
            grid=(c_blocks, l_blocks),
            in_specs=[
                pl.BlockSpec((N, c_tile, l_tile), lambda c, l: (0, c, l)),
                pl.BlockSpec((c_tile, 1), lambda c, l: (c, 0)),
                pl.BlockSpec((c_tile, 1), lambda c, l: (c, 0)),
            ],
            out_specs=(pl.BlockSpec((c_tile, 1), lambda c, l: (c, 0)),
                       pl.BlockSpec((c_tile, 1), lambda c, l: (c, 0))),
            scratch_shapes=[pltpu.VMEM((c_tile, 1), jnp.float32),
                            pltpu.VMEM((c_tile, 1), jnp.float32)],
        ),
        compiler_params=pltpu.CompilerParams(
            dimension_semantics=("parallel", "arbitrary"),
            vmem_limit_bytes=int(vmem_limit)),
        cost_estimate=pl.CostEstimate(
            flops=int(3 * nelem), transcendentals=int(C),
            bytes_accessed=int(nelem * isz + 8 * C)),
    )(x3, gamma, beta)

    y3 = pl.pallas_call(
        _normalize_kernel,
        out_shape=jax.ShapeDtypeStruct((N, C, L), x3.dtype),
        grid_spec=pltpu.PrefetchScalarGridSpec(
            num_scalar_prefetch=0,
            grid=(c_blocks, l_blocks),
            in_specs=[
                pl.BlockSpec((N, c_tile, l_tile), lambda c, l: (0, c, l)),
                pl.BlockSpec((c_tile, 1), lambda c, l: (c, 0)),
                pl.BlockSpec((c_tile, 1), lambda c, l: (c, 0)),
            ],
            out_specs=pl.BlockSpec((N, c_tile, l_tile), lambda c, l: (0, c, l)),
        ),
        compiler_params=pltpu.CompilerParams(
            dimension_semantics=("parallel", "parallel"),
            vmem_limit_bytes=int(vmem_limit)),
        cost_estimate=pl.CostEstimate(
            flops=int(2 * nelem), transcendentals=0,
            bytes_accessed=int(2 * nelem * isz + 8 * C)),
    )(x3, scale, shift)
    return y3


# ---------------------------------------------------------------------------
# Module wrapper
# ---------------------------------------------------------------------------
class CustomBatchNorm2dPallas:
    """JAX/Pallas CustomBatchNorm2d: skip BN entirely when batch size == 1."""

    def __init__(self, channels, eps=_EPS):
        self.channels = channels
        self.eps = eps
        # nn.BatchNorm2d defaults: weight = 1, bias = 0 (deterministic init).
        self.gamma = jnp.ones((channels, 1), dtype=jnp.float32)
        self.beta = jnp.zeros((channels, 1), dtype=jnp.float32)

    def __call__(self, x):
        N, C, H, W = x.shape
        assert C == self.channels
        if N == 1:
            return x  # bs == 1: identity, as in the PyTorch module
        L = H * W
        x3 = x.reshape(N, C, L)                       # free, contiguous reshape
        isz = x.dtype.itemsize
        c_align = _c_align(isz)
        budget = _vmem_budget()

        # Fused-path footprint per channel row: in+out double-buffered + ~3 f32
        # in-kernel temporaries per element.
        per_row_bytes = N * L * (4 * isz + 12)
        c_needed = C if C <= c_align else c_align
        if per_row_bytes * c_needed <= budget:
            max_c = max(c_needed, budget // max(1, per_row_bytes))
            c_tile = _pick_c_tile(C, c_align, max_c)
            y3 = _bn_fused(x3, self.gamma, self.beta, c_tile, budget, self.eps)
        else:
            c_tile, l_tile = _pick_stream_tiles(N, C, L, isz, c_align, budget)
            y3 = _bn_two_pass(x3, self.gamma, self.beta, c_tile, l_tile,
                              budget, self.eps)
        return y3.reshape(N, C, H, W)


# ---------------------------------------------------------------------------
# Self-test
# ---------------------------------------------------------------------------
if __name__ == "__main__":
    key = jax.random.PRNGKey(0)

    # Main path (fused single-pass kernel)
    N, C, H, W = 2, 4, 16, 16
    x = jax.random.normal(key, (N, C, H, W), dtype=jnp.float32) * 2.0 + 0.5
    bn = CustomBatchNorm2dPallas(C)
    y = jax.block_until_ready(bn(x))

    mean = jnp.mean(x, axis=(0, 2, 3), keepdims=True)
    var = jnp.mean((x - mean) ** 2, axis=(0, 2, 3), keepdims=True)
    y_ref = (x - mean) / jnp.sqrt(var + _EPS)
    assert jnp.allclose(y, y_ref, atol=1e-5, rtol=1e-5), "fused path mismatch"

    # bs == 1 path: identity.
    x1 = x[:1]
    y1 = jax.block_until_ready(bn(x1))
    assert jnp.array_equal(y1, x1), "bs==1 path must be identity"

    # Streaming two-pass fallback, exercised directly with small tiles so the
    # cdiv grid + masked lane tail + OOB output-tail handling are covered.
    N2, C2, H2, W2 = 2, 16, 13, 13            # L = 169: not a multiple of 128
    x2 = jax.random.normal(jax.random.PRNGKey(0), (N2, C2, H2, W2),
                           dtype=jnp.float32) + 1.0
    bn2 = CustomBatchNorm2dPallas(C2)
    y2 = _bn_two_pass(x2.reshape(N2, C2, H2 * W2), bn2.gamma, bn2.beta,
                      c_tile=8, l_tile=128, vmem_limit=_vmem_budget())
    y2 = jax.block_until_ready(y2).reshape(N2, C2, H2, W2)
    m2 = jnp.mean(x2, axis=(0, 2, 3), keepdims=True)
    v2 = jnp.mean((x2 - m2) ** 2, axis=(0, 2, 3), keepdims=True)
    y2_ref = (x2 - m2) / jnp.sqrt(v2 + _EPS)
    assert jnp.allclose(y2, y2_ref, atol=1e-4, rtol=1e-4), "streaming path mismatch"

    print("KERNEL_OK")
</pallas_src>

<mosaic_0001>
module attributes {stable_mosaic.version = 11 : i64} {
  func.func @_fused_kernel(%arg0: i32, %arg1: memref<2x4x256xf32, #tpu.memory_space<vmem>>, %arg2: memref<4x1xf32, #tpu.memory_space<vmem>>, %arg3: memref<4x1xf32, #tpu.memory_space<vmem>>, %arg4: memref<2x4x256xf32, #tpu.memory_space<vmem>>) attributes {dimension_semantics = [#tpu.dimension_semantics<parallel>], iteration_bounds = array<i64: 1>, scalar_prefetch = 0 : i64, scratch_operands = 0 : i64, tpu.core_type = #tpu.core_type<tc>, window_params = [{transform_indices = @transform_0, window_bounds = array<i64: 2, 4, 256>}, {transform_indices = @transform_1, window_bounds = array<i64: 4, 1>}, {transform_indices = @transform_2, window_bounds = array<i64: 4, 1>}, {transform_indices = @transform_3, window_bounds = array<i64: 2, 4, 256>}]} {
    %c0 = arith.constant 0 : index
    %c0_0 = arith.constant 0 : index
    %c0_1 = arith.constant 0 : index
    %0 = vector.load %arg1[%c0, %c0_0, %c0_1] : memref<2x4x256xf32, #tpu.memory_space<vmem>>, vector<2x4x256xf32>
    %cst = arith.constant dense<0.000000e+00> : vector<4x256xf32>
    %1 = vector.multi_reduction <add>, %0, %cst [0] : vector<2x4x256xf32> to vector<4x256xf32>
    %cst_2 = arith.constant dense<0.000000e+00> : vector<4xf32>
    %2 = vector.multi_reduction <add>, %1, %cst_2 [1] : vector<4x256xf32> to vector<4xf32>
    %3 = vector.shape_cast %2 : vector<4xf32> to vector<4x1xf32>
    %cst_3 = arith.constant 0.001953125 : f32
    %4 = vector.broadcast %cst_3 : f32 to vector<4x1xf32>
    %5 = arith.mulf %3, %4 : vector<4x1xf32>
    %6 = vector.shape_cast %5 : vector<4x1xf32> to vector<1x4x1xf32>
    %7 = vector.broadcast %6 : vector<1x4x1xf32> to vector<2x4x256xf32>
    %8 = arith.subf %0, %7 : vector<2x4x256xf32>
    %9 = arith.mulf %8, %8 : vector<2x4x256xf32>
    %cst_4 = arith.constant dense<0.000000e+00> : vector<4x256xf32>
    %10 = vector.multi_reduction <add>, %9, %cst_4 [0] : vector<2x4x256xf32> to vector<4x256xf32>
    %cst_5 = arith.constant dense<0.000000e+00> : vector<4xf32>
    %11 = vector.multi_reduction <add>, %10, %cst_5 [1] : vector<4x256xf32> to vector<4xf32>
    %12 = vector.shape_cast %11 : vector<4xf32> to vector<4x1xf32>
    %cst_6 = arith.constant 0.001953125 : f32
    %13 = vector.broadcast %cst_6 : f32 to vector<4x1xf32>
    %14 = arith.mulf %12, %13 : vector<4x1xf32>
    %c0_7 = arith.constant 0 : index
    %c0_8 = arith.constant 0 : index
    %15 = vector.load %arg2[%c0_7, %c0_8] : memref<4x1xf32, #tpu.memory_space<vmem>>, vector<4x1xf32>
    %cst_9 = arith.constant 9.99999974E-6 : f32
    %16 = vector.broadcast %cst_9 : f32 to vector<4x1xf32>
    %17 = arith.addf %14, %16 : vector<4x1xf32>
    %18 = math.rsqrt %17 : vector<4x1xf32>
    %19 = arith.mulf %15, %18 : vector<4x1xf32>
    %c0_10 = arith.constant 0 : index
    %c0_11 = arith.constant 0 : index
    %20 = vector.load %arg3[%c0_10, %c0_11] : memref<4x1xf32, #tpu.memory_space<vmem>>, vector<4x1xf32>
    %21 = vector.shape_cast %19 : vector<4x1xf32> to vector<1x4x1xf32>
    %22 = vector.broadcast %21 : vector<1x4x1xf32> to vector<2x4x256xf32>
    %23 = arith.mulf %8, %22 : vector<2x4x256xf32>
    %24 = vector.shape_cast %20 : vector<4x1xf32> to vector<1x4x1xf32>
    %25 = vector.broadcast %24 : vector<1x4x1xf32> to vector<2x4x256xf32>
    %26 = arith.addf %23, %25 : vector<2x4x256xf32>
    %c0_12 = arith.constant 0 : index
    %c0_13 = arith.constant 0 : index
    %c0_14 = arith.constant 0 : index
    %27 = vector.load %arg4[%c0_12, %c0_13, %c0_14] : memref<2x4x256xf32, #tpu.memory_space<vmem>>, vector<2x4x256xf32>
    tpu.vector_store %arg4[%c0_12, %c0_13, %c0_14], %26 {strides = array<i32>} : memref<2x4x256xf32, #tpu.memory_space<vmem>>, vector<2x4x256xf32>,
    return
  }
  func.func @transform_0(%arg0: i32) -> (i32, i32, i32) {
    %c0_i32 = arith.constant 0 : i32
    %c0_i32_0 = arith.constant 0 : i32
    %c0_i32_1 = arith.constant 0 : i32
    return %c0_i32, %arg0, %c0_i32_0 : i32, i32, i32
  }
  func.func @transform_1(%arg0: i32) -> (i32, i32) {
    %c0_i32 = arith.constant 0 : i32
    %c0_i32_0 = arith.constant 0 : i32
    return %arg0, %c0_i32 : i32, i32
  }
  func.func @transform_2(%arg0: i32) -> (i32, i32) {
    %c0_i32 = arith.constant 0 : i32
    %c0_i32_0 = arith.constant 0 : i32
    return %arg0, %c0_i32 : i32, i32
  }
  func.func @transform_3(%arg0: i32) -> (i32, i32, i32) {
    %c0_i32 = arith.constant 0 : i32
    %c0_i32_0 = arith.constant 0 : i32
    %c0_i32_1 = arith.constant 0 : i32
    return %c0_i32, %arg0, %c0_i32_0 : i32, i32, i32
  }
}

</mosaic_0001>

<llo_original>
// kernel: tpu_custom_call.1
$region0: #{tpu_custom_call.1}
  #allocation0 [shape = 'u32[]', space=smem, size = 0x4, offset = 0x4, fixed_abs, tag = 'smem constant byte address 0x4 - core index']
  #allocation1 [shape = 'u32[144,128]{1,0:T(1,128)}', space=vmem, size = 0x12000, scoped, tag = 'internal scratch']
  %s0 = inlined_call_operand.hbm [shape: f32[2,4,256], index: 0, kind: input, shape index: {}]
  %s1 = inlined_call_operand.vmem [shape: f32[4,1], index: 1, kind: input, shape index: {}]
  %s2 = inlined_call_operand.vmem [shape: f32[4,1], index: 2, kind: input, shape index: {}]
  %s3 = inlined_call_operand.hbm [shape: f32[2,4,256], index: 3, kind: output, shape index: {}]
  %s4 = sld [smem:[#allocation0]]
  $region26: #{tpu_custom_call.1} parent=0
    _
  %s6 = ssub.s32 1, %s4
  %s7 = scalar_select 0, %s6, %s4
  $region1: #{tpu_custom_call.1} parent=0
    #allocation2 [shape = 'u8[8192]{0}', space=vmem, size = 0x2000, scoped, tag = 'input window, operand 0, single buffered']
    #allocation3 [shape = 's32[1]{0}', space=sflag, size = 0x4, scoped, tag = 'scoped memory for tpu_custom_call.1']
    #allocation4 [shape = 's32[1]{0}', space=sflag, size = 0x4, scoped, tag = 'scoped memory for tpu_custom_call.1']
    #allocation5 [shape = 'u8[8192]{0}', space=vmem, size = 0x2000, scoped, tag = 'output window, operand 0, single buffered']
    %8 = vsyncpa [#allocation3], 0
    %9 = vsyncpa [#allocation4], 0
    // Predicated region
    $region2: #{tpu_custom_call.1} parent=1 // pred_check
      _
    $region3: #{tpu_custom_call.1} parent=1 // pred_check_branch
      %11 = sbr.rel (0) target = $region5
    $region4: #{tpu_custom_call.1} parent=1 // pred_region
      %s13 = ssub.s32 256, 256
      %14 = vsyncadd [#allocation3], %s13
      %s15 = sshll.u32 [#allocation2], 4
      %s16 = int_to_ptr.vmem [resolvable:$true] %s15
      %21 = dma.hbm_to_vmem [thread:$0]  %s0, 256, %s16, [#allocation3], 128, 128, 8
    $region5: #{tpu_custom_call.1} parent=1 // pred_fallthru
      _
    // Predicated region
    $region6: #{tpu_custom_call.1} parent=1 // pred_check
      _
    $region7: #{tpu_custom_call.1} parent=1 // pred_check_branch
      %23 = sbr.rel (0) target = $region9
    $region8: #{tpu_custom_call.1} parent=1 // pred_region
      _
    $region9: #{tpu_custom_call.1} parent=1 // pred_fallthru
      _
    // Predicated region
    $region10: #{tpu_custom_call.1} parent=1 // pred_check
      _
    $region11: #{tpu_custom_call.1} parent=1 // pred_check_branch
      %25 = sbr.rel (0) target = $region13
    $region12: #{tpu_custom_call.1} parent=1 // pred_region
      _
    $region13: #{tpu_custom_call.1} parent=1 // pred_fallthru
      _
    // Predicated region
    $region14: #{tpu_custom_call.1} parent=1 // pred_check
      _
    $region15: #{tpu_custom_call.1} parent=1 // pred_check_branch
      %27 = sbr.rel (0) target = $region17
    $region16: #{tpu_custom_call.1} parent=1 // pred_region
      %28 = dma.done [#allocation3], 256
    $region17: #{tpu_custom_call.1} parent=1 // pred_fallthru
      _
    %v29 = vld [vmem:[#allocation2] sm:$0xff]
    %v30 = vld [vmem:[#allocation2 + $0x8] sm:$0xff]
    %v33 = vcombine.high %v29, %v29
    %v34 = vcombine.high %v30, %v30
    %vm37 = vcmask 1043456
    %v38 = vsel %vm37, %v29, 0.0
    %v39 = vsel %vm37, %v30, 0.0
    %v40 = vadd.f32 %v38, %v39
    %v41 = vsel %vm37, %v33, 0.0
    %v42 = vsel %vm37, %v34, 0.0
    %v43 = vadd.f32 %v41, %v42
    %v44 = vsel %vm37, %v40, 0.0
    %v45 = vsel %vm37, %v43, 0.0
    %v46 = vadd.f32 %v44, %v45
    %47 = vadd.xlane.f32.xlu0 %v46
    %v48 = vpop.xlane.xlu0 %47
    %v49 = vmul.f32 %v48, 0.001953125
    %v52 = vunpack.c.l.s4 839922192
    %v53 = vunpack.c.0.s8 %v52
    %v54 = vlaneseq
    %v55 = vshrl.u32 %v54, 7
    %v56 = vsub.s32 %v53, %v55
    %v57 = vrot.slane %v49, %v56
    %v59 = vsub.f32 %v29, %v57
    %v60 = vsub.f32 %v30, %v57
    %v61 = vmul.f32 %v59, %v59
    %v62 = vmul.f32 %v60, %v60
    %v65 = vcombine.high %v61, %v61
    %v66 = vcombine.high %v62, %v62
    %v69 = vsel %vm37, %v61, 0.0
    %v70 = vsel %vm37, %v62, 0.0
    %v71 = vadd.f32 %v69, %v70
    %v72 = vsel %vm37, %v65, 0.0
    %v73 = vsel %vm37, %v66, 0.0
    %v74 = vadd.f32 %v72, %v73
    %v75 = vsel %vm37, %v71, 0.0
    %v76 = vsel %vm37, %v74, 0.0
    %v77 = vadd.f32 %v75, %v76
    %78 = vadd.xlane.f32.xlu0 %v77
    %v79 = vpop.xlane.xlu0 %78
    %v80 = vmul.f32 %v79, 0.001953125
    %v81 = vld [vmem:[%s1] sm:$0xf]
    %v82 = vadd.f32 %v80, 1e-05
    %v83 = vrsqrt.pop %v82
    %v84 = vmul.f32 %v81, %v83
    %v85 = vld [vmem:[%s2] sm:$0xf]
    %87 = vset.pattern.permute.xlu0 0
    %88 = vperm.xlu0 %87, %v84
    %v89 = vpop.permute.xlu0 %88
    %v91 = vunpack.c.l.s4 839922192
    %v92 = vunpack.c.0.s8 %v91
    %v93 = vlaneseq
    %v94 = vshrl.u32 %v93, 7
    %v95 = vsub.s32 %v92, %v94
    %v96 = vrot.slane %v89, %v95
    %v98 = vmul.f32 %v59, %v96
    %v99 = vmul.f32 %v60, %v96
    %101 = vset.pattern.permute.xlu0 0
    %102 = vperm.xlu0 %101, %v85
    %v103 = vpop.permute.xlu0 %102
    %v105 = vunpack.c.l.s4 839922192
    %v106 = vunpack.c.0.s8 %v105
    %v107 = vlaneseq
    %v108 = vshrl.u32 %v107, 7
    %v109 = vsub.s32 %v106, %v108
    %v110 = vrot.slane %v103, %v109
    %v112 = vadd.f32 %v98, %v110
    %v113 = vadd.f32 %v99, %v110
    %114 = vst [vmem:[#allocation5] sm:$0xff] %v112
    %115 = vst [vmem:[#allocation5 + $0x8] sm:$0xff] %v113
    // Predicated region
    $region18: #{tpu_custom_call.1} parent=1 // pred_check
      _
    $region19: #{tpu_custom_call.1} parent=1 // pred_check_branch
      %117 = sbr.rel (0) target = $region21
    $region20: #{tpu_custom_call.1} parent=1 // pred_region
      %s119 = ssub.s32 256, 256
      %120 = vsyncadd [#allocation4], %s119
      %s121 = sshll.u32 [#allocation5], 4
      %s122 = int_to_ptr.vmem [resolvable:$true] %s121
      %127 = dma.vmem_to_hbm [thread:$0]  %s122, 256, %s3, [#allocation4], 128, 128, 8
    $region21: #{tpu_custom_call.1} parent=1 // pred_fallthru
      _
    // Predicated region
    $region22: #{tpu_custom_call.1} parent=1 // pred_check
      _
    $region23: #{tpu_custom_call.1} parent=1 // pred_check_branch
      %129 = sbr.rel (0) target = $region25
    $region24: #{tpu_custom_call.1} parent=1 // pred_region
      %130 = dma.done [#allocation4], 256
    $region25: #{tpu_custom_call.1} parent=1 // pred_fallthru
      _
    %131 = vsyncpa [#allocation3], 1
    %132 = vsyncpa [#allocation4], 1

</llo_original>
